<compile_context>
chip_gen: v6e
topology: v6e:2x2x1
jax: 0.10.0
libtpu: 0.0.40
codegen_flags: <defaults>
</compile_context>

<pallas_src>
import jax
import jax.numpy as jnp
from jax import lax
from jax.experimental import pallas as pl
from jax.experimental.pallas import tpu as pltpu


def _round_up(x, m):
    return ((x + m - 1) // m) * m


def _gelu_exact(x):
    # Matches PyTorch ACT2FN["gelu"] (erf-based, not the tanh approximation).
    return 0.5 * x * (1.0 + lax.erf(x * 0.7071067811865476))


def _cls_head_kernel(x_ref, w1_ref, b1_ref, w2_ref, b2_ref, o_ref):
    # x_ref:  [tb, H]   CLS-token tile
    # w1_ref: [H, H]    dense weight, [in, out] layout (pre-transposed)
    # b1_ref: [1, H]    dense bias
    # w2_ref: [H, Lp]   out_proj weight, [in, out] layout, out dim lane-padded
    # b2_ref: [1, Lp]   out_proj bias (lane-padded)
    # o_ref:  [tb, Lp]  padded logits
    x = x_ref[...].astype(w1_ref.dtype)      # bf16 weights -> bf16 MXU path

    h = jnp.dot(x, w1_ref[...], preferred_element_type=jnp.float32)
    h = h + b1_ref[...].astype(jnp.float32)
    h = _gelu_exact(h)

    out = jnp.dot(h.astype(w2_ref.dtype), w2_ref[...],
                  preferred_element_type=jnp.float32)
    out = out + b2_ref[...].astype(jnp.float32)

    o_ref[...] = out.astype(o_ref.dtype)


def _device_kind():
    try:
        return jax.devices()[0].device_kind.lower()
    except Exception:
        return ""


def _vmem_capacity_bytes():
    try:
        return int(pltpu.get_tpu_info().vmem_capacity_bytes)
    except Exception:
        return 64 * 1024 * 1024   # conservative default: v7x per-TC VMEM


def roformer_classification_head(features, w_dense, b_dense, w_out, b_out):
    """features: [B, S, H]; weights in PyTorch Linear layout ([out, in]).

    Returns logits [B, num_labels]. Dropout layers are identity (eval mode).
    """
    B, S, H = features.shape
    L = w_out.shape[0]                  # num_labels
    Lp = _round_up(L, 128)              # lane-dense logits width

    # One-time parameter glue (pre-transpose to [in, out], lane-pad out_proj).
    # In production do this once at weight-load time, not per call.
    w1 = jnp.transpose(w_dense)                                  # [H, H]
    b1 = b_dense.reshape(1, H)
    w2 = jnp.pad(jnp.transpose(w_out), ((0, 0), (0, Lp - L)))    # [H, Lp]
    b2 = jnp.pad(b_out, ((0, Lp - L),)).reshape(1, Lp)

    # ---- generation-aware batch tiling --------------------------------------
    kind = _device_kind()
    multi_tc = any(t in kind for t in ("v4", "v5p", "v7", "7x"))
    if multi_tc and B >= 16:
        # >=2 grid steps so the "parallel" axis can shard across TensorCores
        # and CLS-tile DMAs pipeline against compute; 8-row-aligned tiles.
        n_steps = max(2, pl.cdiv(B, 256))
        tb = min(B, _round_up(pl.cdiv(B, n_steps), 8))
    else:
        # Single TensorCore: extra grid steps are pure per-step overhead for
        # small/medium batches (weight-DMA / latency bound regime).
        tb = B if B <= 512 else 256
    grid = (pl.cdiv(B, tb),)

    # ---- CLS-token handling --------------------------------------------------
    x_bytes = jnp.dtype(features.dtype).itemsize
    if H * x_bytes <= 512:
        # Tiny rows: a strided DMA gather would move <=512 B per chunk; let
        # XLA fuse the slice into the upstream producer instead.
        x_in = features[:, 0, :]
        x_spec = pl.BlockSpec((tb, H), lambda b: (b, 0))
    else:
        # Fold CLS selection into the BlockSpec: seq dim squeezed, index 0.
        x_in = features
        x_spec = pl.BlockSpec((tb, None, H), lambda b: (b, 0, 0))

    w_bytes = jnp.dtype(w_dense.dtype).itemsize
    vmem_cap = (_vmem_capacity_bytes() * 7) // 8       # leave on-chip headroom

    # TODO(synk): once H*H*w_bytes (single-buffered) approaches ~1/3 of
    # vmem_cap (f32 H >= ~3072 on v7x, ~4096+ on v5e/v6e), add a trailing
    # "arbitrary" K grid axis over hidden-in with a VMEM f32 accumulator
    # (pl.when init on k==0, GELU + out_proj finalize on k==last).
    # TODO(synk): for small-batch inference this head is weight-HBM bound; the
    # structural fix is a cross-pallas_call prefetch of W_dense behind the
    # final encoder layer, not in-kernel micro-tuning.

    def _run(weight_buffer_count):
        def _const_spec(shape):
            idx = lambda b, _n=len(shape): (0,) * _n
            if weight_buffer_count == 1:
                # Constant index map -> single-buffer the resident weight.
                return pl.BlockSpec(shape, idx, pipeline_mode=pl.Buffered(1))
            return pl.BlockSpec(shape, idx)

        vmem_req = (
            2 * tb * H * x_bytes                                     # CLS tiles
            + 2 * tb * Lp * x_bytes                                  # logits tiles
            + weight_buffer_count * (H * H + H * Lp + H + Lp) * w_bytes
            + tb * H * 4 + tb * Lp * 4                               # f32 intermediates
            + (4 << 20)                                              # compiler scratch
        )
        vmem_limit = int(max(min(vmem_req, vmem_cap), min(16 << 20, vmem_cap)))

        return pl.pallas_call(
            _cls_head_kernel,
            out_shape=jax.ShapeDtypeStruct((B, Lp), features.dtype),
            grid=grid,
            in_specs=[
                x_spec,
                _const_spec((H, H)),
                _const_spec((1, H)),
                _const_spec((H, Lp)),
                _const_spec((1, Lp)),
            ],
            out_specs=pl.BlockSpec((tb, Lp), lambda b: (b, 0)),
            compiler_params=pltpu.CompilerParams(
                dimension_semantics=("parallel",),
                vmem_limit_bytes=vmem_limit,
            ),
        )(x_in, w1, b1, w2, b2)

    try:
        logits_padded = _run(1)        # single-buffered resident weights
    except Exception:
        logits_padded = _run(2)        # fallback: default double buffering

    return logits_padded[:, :L]


if __name__ == "__main__":
    # Small config consistent with the module: hidden_size=32, num_labels=4.
    B, S, H, NUM_LABELS = 2, 8, 32, 4

    key = jax.random.PRNGKey(0)
    k_feat, k_w1, k_b1, k_w2, k_b2 = jax.random.split(key, 5)

    features = jax.random.normal(k_feat, (B, S, H), dtype=jnp.float32)

    # PyTorch Linear stores weight as [out, in]; the wrapper accepts that.
    w_dense = jax.random.normal(k_w1, (H, H), dtype=jnp.float32) * 0.05
    b_dense = jax.random.normal(k_b1, (H,), dtype=jnp.float32) * 0.05
    w_out = jax.random.normal(k_w2, (NUM_LABELS, H), dtype=jnp.float32) * 0.05
    b_out = jax.random.normal(k_b2, (NUM_LABELS,), dtype=jnp.float32) * 0.05

    logits = roformer_classification_head(features, w_dense, b_dense, w_out, b_out)
    logits = jax.block_until_ready(logits)

    # Pure-JAX reference (dropout = identity in eval mode).
    x = features[:, 0, :]
    h = jax.nn.gelu(x @ w_dense.T + b_dense, approximate=False)
    ref = h @ w_out.T + b_out

    assert logits.shape == (B, NUM_LABELS)
    assert jnp.allclose(logits, ref, atol=1e-5, rtol=1e-5)

    print("KERNEL_OK")
</pallas_src>

<mosaic_0001>
module attributes {stable_mosaic.version = 11 : i64} {
  func.func @_cls_head_kernel(%arg0: i32, %arg1: memref<2x32xf32, #tpu.memory_space<vmem>>, %arg2: memref<32x32xf32, #tpu.memory_space<vmem>>, %arg3: memref<1x32xf32, #tpu.memory_space<vmem>>, %arg4: memref<32x128xf32, #tpu.memory_space<vmem>>, %arg5: memref<1x128xf32, #tpu.memory_space<vmem>>, %arg6: memref<2x128xf32, #tpu.memory_space<vmem>>) attributes {dimension_semantics = [#tpu.dimension_semantics<parallel>], iteration_bounds = array<i64: 1>, scalar_prefetch = 0 : i64, scratch_operands = 0 : i64, tpu.core_type = #tpu.core_type<tc>, window_params = [{transform_indices = @transform_0, window_bounds = array<i64: 2, 32>}, {pipeline_mode = #tpu.pipeline_mode<synchronous>, transform_indices = @transform_1, window_bounds = array<i64: 32, 32>}, {pipeline_mode = #tpu.pipeline_mode<synchronous>, transform_indices = @transform_2, window_bounds = array<i64: 1, 32>}, {pipeline_mode = #tpu.pipeline_mode<synchronous>, transform_indices = @transform_3, window_bounds = array<i64: 32, 128>}, {pipeline_mode = #tpu.pipeline_mode<synchronous>, transform_indices = @transform_4, window_bounds = array<i64: 1, 128>}, {transform_indices = @transform_5, window_bounds = array<i64: 2, 128>}]} {
    %c0 = arith.constant 0 : index
    %c0_0 = arith.constant 0 : index
    %0 = vector.load %arg1[%c0, %c0_0] : memref<2x32xf32, #tpu.memory_space<vmem>>, vector<2x32xf32>
    %c0_1 = arith.constant 0 : index
    %c0_2 = arith.constant 0 : index
    %1 = vector.load %arg2[%c0_1, %c0_2] : memref<32x32xf32, #tpu.memory_space<vmem>>, vector<32x32xf32>
    %cst = arith.constant dense<0.000000e+00> : vector<2x32xf32>
    %2 = tpu.matmul %0, %1, %cst {dimension_numbers = #tpu.dot_dimension_numbers<[1], [0], [0], [1], [0, 0, 1, 1], [], []>} : vector<2x32xf32>, vector<32x32xf32>, vector<2x32xf32> -> vector<2x32xf32>
    %c0_3 = arith.constant 0 : index
    %c0_4 = arith.constant 0 : index
    %3 = vector.load %arg3[%c0_3, %c0_4] : memref<1x32xf32, #tpu.memory_space<vmem>>, vector<1x32xf32>
    %4 = vector.broadcast %3 : vector<1x32xf32> to vector<2x32xf32>
    %5 = arith.addf %2, %4 : vector<2x32xf32>
    %cst_5 = arith.constant 5.000000e-01 : f32
    %6 = vector.broadcast %cst_5 : f32 to vector<2x32xf32>
    %7 = arith.mulf %6, %5 : vector<2x32xf32>
    %cst_6 = arith.constant 0.707106769 : f32
    %8 = vector.broadcast %cst_6 : f32 to vector<2x32xf32>
    %9 = arith.mulf %5, %8 : vector<2x32xf32>
    %10 = math.erf %9 : vector<2x32xf32>
    %cst_7 = arith.constant 1.000000e+00 : f32
    %11 = vector.broadcast %cst_7 : f32 to vector<2x32xf32>
    %12 = arith.addf %11, %10 : vector<2x32xf32>
    %13 = arith.mulf %7, %12 : vector<2x32xf32>
    %c0_8 = arith.constant 0 : index
    %c0_9 = arith.constant 0 : index
    %14 = vector.load %arg4[%c0_8, %c0_9] : memref<32x128xf32, #tpu.memory_space<vmem>>, vector<32x128xf32>
    %cst_10 = arith.constant dense<0.000000e+00> : vector<2x128xf32>
    %15 = tpu.matmul %13, %14, %cst_10 {dimension_numbers = #tpu.dot_dimension_numbers<[1], [0], [0], [1], [0, 0, 1, 1], [], []>} : vector<2x32xf32>, vector<32x128xf32>, vector<2x128xf32> -> vector<2x128xf32>
    %c0_11 = arith.constant 0 : index
    %c0_12 = arith.constant 0 : index
    %16 = vector.load %arg5[%c0_11, %c0_12] : memref<1x128xf32, #tpu.memory_space<vmem>>, vector<1x128xf32>
    %17 = vector.broadcast %16 : vector<1x128xf32> to vector<2x128xf32>
    %18 = arith.addf %15, %17 : vector<2x128xf32>
    %c0_13 = arith.constant 0 : index
    %c0_14 = arith.constant 0 : index
    %19 = vector.load %arg6[%c0_13, %c0_14] : memref<2x128xf32, #tpu.memory_space<vmem>>, vector<2x128xf32>
    tpu.vector_store %arg6[%c0_13, %c0_14], %18 {strides = array<i32>} : memref<2x128xf32, #tpu.memory_space<vmem>>, vector<2x128xf32>,
    return
  }
  func.func @transform_0(%arg0: i32) -> (i32, i32) {
    %c0_i32 = arith.constant 0 : i32
    %c0_i32_0 = arith.constant 0 : i32
    return %arg0, %c0_i32 : i32, i32
  }
  func.func @transform_1(%arg0: i32) -> (i32, i32) {
    %c0_i32 = arith.constant 0 : i32
    %c0_i32_0 = arith.constant 0 : i32
    %c0_i32_1 = arith.constant 0 : i32
    return %c0_i32, %c0_i32_0 : i32, i32
  }
  func.func @transform_2(%arg0: i32) -> (i32, i32) {
    %c0_i32 = arith.constant 0 : i32
    %c0_i32_0 = arith.constant 0 : i32
    %c0_i32_1 = arith.constant 0 : i32
    return %c0_i32, %c0_i32_0 : i32, i32
  }
  func.func @transform_3(%arg0: i32) -> (i32, i32) {
    %c0_i32 = arith.constant 0 : i32
    %c0_i32_0 = arith.constant 0 : i32
    %c0_i32_1 = arith.constant 0 : i32
    return %c0_i32, %c0_i32_0 : i32, i32
  }
  func.func @transform_4(%arg0: i32) -> (i32, i32) {
    %c0_i32 = arith.constant 0 : i32
    %c0_i32_0 = arith.constant 0 : i32
    %c0_i32_1 = arith.constant 0 : i32
    return %c0_i32, %c0_i32_0 : i32, i32
  }
  func.func @transform_5(%arg0: i32) -> (i32, i32) {
    %c0_i32 = arith.constant 0 : i32
    %c0_i32_0 = arith.constant 0 : i32
    return %arg0, %c0_i32 : i32, i32
  }
}

module attributes {stable_mosaic.version = 11 : i64} {
  func.func @_cls_head_kernel(%arg0: i32, %arg1: memref<2x32xf32, #tpu.memory_space<vmem>>, %arg2: memref<32x32xf32, #tpu.memory_space<vmem>>, %arg3: memref<1x32xf32, #tpu.memory_space<vmem>>, %arg4: memref<32x128xf32, #tpu.memory_space<vmem>>, %arg5: memref<1x128xf32, #tpu.memory_space<vmem>>, %arg6: memref<2x128xf32, #tpu.memory_space<vmem>>) attributes {dimension_semantics = [#tpu.dimension_semantics<parallel>], iteration_bounds = array<i64: 1>, scalar_prefetch = 0 : i64, scratch_operands = 0 : i64, tpu.core_type = #tpu.core_type<tc>, window_params = [{transform_indices = @transform_0, window_bounds = array<i64: 2, 32>}, {pipeline_mode = #tpu.pipeline_mode<synchronous>, transform_indices = @transform_1, window_bounds = array<i64: 32, 32>}, {pipeline_mode = #tpu.pipeline_mode<synchronous>, transform_indices = @transform_2, window_bounds = array<i64: 1, 32>}, {pipeline_mode = #tpu.pipeline_mode<synchronous>, transform_indices = @transform_3, window_bounds = array<i64: 32, 128>}, {pipeline_mode = #tpu.pipeline_mode<synchronous>, transform_indices = @transform_4, window_bounds = array<i64: 1, 128>}, {transform_indices = @transform_5, window_bounds = array<i64: 2, 128>}]} {
    %c0 = arith.constant 0 : index
    %c0_0 = arith.constant 0 : index
    %0 = vector.load %arg1[%c0, %c0_0] : memref<2x32xf32, #tpu.memory_space<vmem>>, vector<2x32xf32>
    %c0_1 = arith.constant 0 : index
    %c0_2 = arith.constant 0 : index
    %1 = vector.load %arg2[%c0_1, %c0_2] : memref<32x32xf32, #tpu.memory_space<vmem>>, vector<32x32xf32>
    %cst = arith.constant dense<0.000000e+00> : vector<2x32xf32>
    %2 = tpu.matmul %0, %1, %cst {dimension_numbers = #tpu.dot_dimension_numbers<[1], [0], [0], [1], [0, 0, 1, 1], [], []>} : vector<2x32xf32>, vector<32x32xf32>, vector<2x32xf32> -> vector<2x32xf32>
    %c0_3 = arith.constant 0 : index
    %c0_4 = arith.constant 0 : index
    %3 = vector.load %arg3[%c0_3, %c0_4] : memref<1x32xf32, #tpu.memory_space<vmem>>, vector<1x32xf32>
    %4 = vector.broadcast %3 : vector<1x32xf32> to vector<2x32xf32>
    %5 = arith.addf %2, %4 : vector<2x32xf32>
    %cst_5 = arith.constant 5.000000e-01 : f32
    %6 = vector.broadcast %cst_5 : f32 to vector<2x32xf32>
    %7 = arith.mulf %6, %5 : vector<2x32xf32>
    %cst_6 = arith.constant 0.707106769 : f32
    %8 = vector.broadcast %cst_6 : f32 to vector<2x32xf32>
    %9 = arith.mulf %5, %8 : vector<2x32xf32>
    %10 = math.erf %9 : vector<2x32xf32>
    %cst_7 = arith.constant 1.000000e+00 : f32
    %11 = vector.broadcast %cst_7 : f32 to vector<2x32xf32>
    %12 = arith.addf %11, %10 : vector<2x32xf32>
    %13 = arith.mulf %7, %12 : vector<2x32xf32>
    %c0_8 = arith.constant 0 : index
    %c0_9 = arith.constant 0 : index
    %14 = vector.load %arg4[%c0_8, %c0_9] : memref<32x128xf32, #tpu.memory_space<vmem>>, vector<32x128xf32>
    %cst_10 = arith.constant dense<0.000000e+00> : vector<2x128xf32>
    %15 = tpu.matmul %13, %14, %cst_10 {dimension_numbers = #tpu.dot_dimension_numbers<[1], [0], [0], [1], [0, 0, 1, 1], [], []>} : vector<2x32xf32>, vector<32x128xf32>, vector<2x128xf32> -> vector<2x128xf32>
    %c0_11 = arith.constant 0 : index
    %c0_12 = arith.constant 0 : index
    %16 = vector.load %arg5[%c0_11, %c0_12] : memref<1x128xf32, #tpu.memory_space<vmem>>, vector<1x128xf32>
    %17 = vector.broadcast %16 : vector<1x128xf32> to vector<2x128xf32>
    %18 = arith.addf %15, %17 : vector<2x128xf32>
    %c0_13 = arith.constant 0 : index
    %c0_14 = arith.constant 0 : index
    %19 = vector.load %arg6[%c0_13, %c0_14] : memref<2x128xf32, #tpu.memory_space<vmem>>, vector<2x128xf32>
    tpu.vector_store %arg6[%c0_13, %c0_14], %18 {strides = array<i32>} : memref<2x128xf32, #tpu.memory_space<vmem>>, vector<2x128xf32>,
    return
  }
  func.func @transform_0(%arg0: i32) -> (i32, i32) {
    %c0_i32 = arith.constant 0 : i32
    %c0_i32_0 = arith.constant 0 : i32
    return %arg0, %c0_i32 : i32, i32
  }
  func.func @transform_1(%arg0: i32) -> (i32, i32) {
    %c0_i32 = arith.constant 0 : i32
    %c0_i32_0 = arith.constant 0 : i32
    %c0_i32_1 = arith.constant 0 : i32
    return %c0_i32, %c0_i32_0 : i32, i32
  }
  func.func @transform_2(%arg0: i32) -> (i32, i32) {
    %c0_i32 = arith.constant 0 : i32
    %c0_i32_0 = arith.constant 0 : i32
    %c0_i32_1 = arith.constant 0 : i32
    return %c0_i32, %c0_i32_0 : i32, i32
  }
  func.func @transform_3(%arg0: i32) -> (i32, i32) {
    %c0_i32 = arith.constant 0 : i32
    %c0_i32_0 = arith.constant 0 : i32
    %c0_i32_1 = arith.constant 0 : i32
    return %c0_i32, %c0_i32_0 : i32, i32
  }
  func.func @transform_4(%arg0: i32) -> (i32, i32) {
    %c0_i32 = arith.constant 0 : i32
    %c0_i32_0 = arith.constant 0 : i32
    %c0_i32_1 = arith.constant 0 : i32
    return %c0_i32, %c0_i32_0 : i32, i32
  }
  func.func @transform_5(%arg0: i32) -> (i32, i32) {
    %c0_i32 = arith.constant 0 : i32
    %c0_i32_0 = arith.constant 0 : i32
    return %arg0, %c0_i32 : i32, i32
  }
}

</mosaic_0001>

<llo_original>
// kernel: tpu_custom_call.1
$region0: #{tpu_custom_call.1}
  #allocation0 [shape = 'u32[]', space=smem, size = 0x4, offset = 0x4, fixed_abs, tag = 'smem constant byte address 0x4 - core index']
  #allocation1 [shape = 'u32[144,128]{1,0:T(1,128)}', space=vmem, size = 0x12000, scoped, tag = 'internal scratch']
  %s0 = inlined_call_operand.hbm [shape: f32[2,32], index: 0, kind: input, shape index: {}]
  %s1 = inlined_call_operand.hbm [shape: f32[32,32], index: 1, kind: input, shape index: {}]
  %s2 = inlined_call_operand.vmem [shape: f32[1,32], index: 2, kind: input, shape index: {}]
  %s3 = inlined_call_operand.hbm [shape: f32[32,128], index: 3, kind: input, shape index: {}]
  %s4 = inlined_call_operand.vmem [shape: f32[1,128], index: 4, kind: input, shape index: {}]
  %s5 = inlined_call_operand.hbm [shape: f32[2,128], index: 5, kind: output, shape index: {}]
  %s6 = sld [smem:[#allocation0]]
  $region42: #{tpu_custom_call.1} parent=0
    _
  %s8 = ssub.s32 1, %s6
  %s9 = scalar_select 0, %s8, %s6
  $region1: #{tpu_custom_call.1} parent=0
    #allocation2 [shape = 'u8[1024]{0}', space=vmem, size = 0x400, scoped, tag = 'input window, operand 0, single buffered']
    #allocation3 [shape = 's32[1]{0}', space=sflag, size = 0x4, scoped, tag = 'scoped memory for tpu_custom_call.1']
    #allocation4 [shape = 's32[1]{0}', space=sflag, size = 0x4, scoped, tag = 'scoped memory for tpu_custom_call.1']
    #allocation5 [shape = 'u8[16384]{0}', space=vmem, size = 0x4000, scoped, tag = 'input window, operand 1, single buffered']
    #allocation6 [shape = 's32[1]{0}', space=sflag, size = 0x4, scoped, tag = 'scoped memory for tpu_custom_call.1']
    #allocation7 [shape = 'u8[16384]{0}', space=vmem, size = 0x4000, scoped, tag = 'input window, operand 3, single buffered']
    #allocation8 [shape = 'u8[1024]{0}', space=vmem, size = 0x400, scoped, tag = 'output window, operand 0, single buffered']
    %10 = vsyncpa [#allocation3], 0
    %11 = vsyncpa [#allocation6], 0
    %12 = vsyncpa [#allocation4], 0
    // Predicated region
    $region2: #{tpu_custom_call.1} parent=1 // pred_check
      _
    $region3: #{tpu_custom_call.1} parent=1 // pred_check_branch
      %14 = sbr.rel (0) target = $region5
    $region4: #{tpu_custom_call.1} parent=1 // pred_region
      %s16 = ssub.s32 32, 32
      %17 = vsyncadd [#allocation3], %s16
      %s19 = sshll.u32 [#allocation2], 4
      %s20 = int_to_ptr.vmem [resolvable:$true] %s19
      %22 = dma.hbm_to_vmem [thread:$0]  %s0, 32, %s20, [#allocation3]
    $region5: #{tpu_custom_call.1} parent=1 // pred_fallthru
      _
    // Predicated region
    $region6: #{tpu_custom_call.1} parent=1 // pred_check
      _
    $region7: #{tpu_custom_call.1} parent=1 // pred_check_branch
      %24 = sbr.rel (0) target = $region9
    $region8: #{tpu_custom_call.1} parent=1 // pred_region
      %s26 = ssub.s32 512, 512
      %27 = vsyncadd [#allocation6], %s26
      %s28 = sshll.u32 [#allocation5], 4
      %s29 = int_to_ptr.vmem [resolvable:$true] %s28
      %34 = dma.hbm_to_vmem [thread:$0]  %s1, 512, %s29, [#allocation6], 128, 128, 8
    $region9: #{tpu_custom_call.1} parent=1 // pred_fallthru
      _
    // Predicated region
    $region10: #{tpu_custom_call.1} parent=1 // pred_check
      _
    $region11: #{tpu_custom_call.1} parent=1 // pred_check_branch
      %36 = sbr.rel (0) target = $region13
    $region12: #{tpu_custom_call.1} parent=1 // pred_region
      _
    $region13: #{tpu_custom_call.1} parent=1 // pred_fallthru
      _
    // Predicated region
    $region14: #{tpu_custom_call.1} parent=1 // pred_check
      _
    $region15: #{tpu_custom_call.1} parent=1 // pred_check_branch
      %38 = sbr.rel (0) target = $region17
    $region16: #{tpu_custom_call.1} parent=1 // pred_region
      %s40 = ssub.s32 512, 512
      %41 = vsyncadd [#allocation6], %s40
      %s42 = sshll.u32 [#allocation7], 4
      %s43 = int_to_ptr.vmem [resolvable:$true] %s42
      %48 = dma.hbm_to_vmem [thread:$0]  %s3, 512, %s43, [#allocation6], 128, 128, 8
    $region17: #{tpu_custom_call.1} parent=1 // pred_fallthru
      _
    // Predicated region
    $region18: #{tpu_custom_call.1} parent=1 // pred_check
      _
    $region19: #{tpu_custom_call.1} parent=1 // pred_check_branch
      %50 = sbr.rel (0) target = $region21
    $region20: #{tpu_custom_call.1} parent=1 // pred_region
      _
    $region21: #{tpu_custom_call.1} parent=1 // pred_fallthru
      _
    // Predicated region
    $region22: #{tpu_custom_call.1} parent=1 // pred_check
      _
    $region23: #{tpu_custom_call.1} parent=1 // pred_check_branch
      %52 = sbr.rel (0) target = $region25
    $region24: #{tpu_custom_call.1} parent=1 // pred_region
      %53 = dma.done [#allocation3], 32
    $region25: #{tpu_custom_call.1} parent=1 // pred_fallthru
      _
    // Predicated region
    $region26: #{tpu_custom_call.1} parent=1 // pred_check
      _
    $region27: #{tpu_custom_call.1} parent=1 // pred_check_branch
      %55 = sbr.rel (0) target = $region29
    $region28: #{tpu_custom_call.1} parent=1 // pred_region
      %56 = dma.done [#allocation6], 512
    $region29: #{tpu_custom_call.1} parent=1 // pred_fallthru
      _
    // Predicated region
    $region30: #{tpu_custom_call.1} parent=1 // pred_check
      _
    $region31: #{tpu_custom_call.1} parent=1 // pred_check_branch
      %58 = sbr.rel (0) target = $region33
    $region32: #{tpu_custom_call.1} parent=1 // pred_region
      %59 = dma.done [#allocation6], 512
    $region33: #{tpu_custom_call.1} parent=1 // pred_fallthru
      _
    %v60 = vld [vmem:[#allocation2] sm:$0x3]
    %v61 = vld [vmem:[#allocation5] sm:$0xff]
    %v62 = vld [vmem:[#allocation5 + $0x8] sm:$0xff]
    %v63 = vld [vmem:[#allocation5 + $0x10] sm:$0xff]
    %v64 = vld [vmem:[#allocation5 + $0x18] sm:$0xff]
    %v65 = vld [vmem:[%s2] sm:$0x1]
    %v67 = vlaneseq
    %v68 = vshrl.u32 %v67, 7
    %v69 = vsub.s32 0, %v68
    %v70 = vrot.slane %v65, %v69
    %vm72 = vcmask 261120
    %v74 = vsel %vm72, %v60, 0
    %76 = vmatprep.subr.mxu0 0.0
    %77 = vmatpush1.msra.mxu0 0.0
    %78 = vmatprep.subr.mxu0 0.0
    %79 = vmatpush1.msra.mxu0 0.0
    %80 = vmatprep.subr.mxu0 0.0
    %81 = vmatpush1.msra.mxu0 0.0
    %82 = vmatprep.subr.mxu0 0.0
    %83 = vmatpush1.msra.mxu0 0.0
    %84 = vmatprep.subr.mxu0 0.0
    %85 = vmatpush1.msra.mxu0 0.0
    %86 = vmatprep.subr.mxu0 0.0
    %87 = vmatpush1.msra.mxu0 0.0
    %88 = vmatprep.subr.mxu0 0.0
    %89 = vmatpush1.msra.mxu0 0.0
    %90 = vmatprep.subr.mxu0 0.0
    %91 = vmatpush1.msra.mxu0 0.0
    %92 = vmatprep.subr.mxu0 0.0
    %93 = vmatpush1.msra.mxu0 0.0
    %94 = vmatprep.subr.mxu0 0.0
    %95 = vmatpush1.msra.mxu0 0.0
    %96 = vmatprep.subr.mxu0 0.0
    %97 = vmatpush1.msra.mxu0 0.0
    %98 = vmatprep.subr.mxu0 0.0
    %99 = vmatpush1.msra.mxu0 0.0
    %100 = vmatprep.subr.mxu0 0.0
    %101 = vmatpush1.msra.mxu0 %v64
    %102 = vmatprep.subr.mxu0 0.0
    %103 = vmatpush1.msra.mxu0 %v63
    %104 = vmatprep.subr.mxu0 0.0
    %105 = vmatpush1.msra.mxu0 %v62
    %106 = vmatprep.subr.mxu0 0.0
    %107 = vmatpush1.msra.mxu0 %v61
    %108 = vmatprep.subr.mxu0 0.0
    %109 = vmatpush2.msra.mxu0 0.0
    %110 = vmatprep.subr.mxu0 0.0
    %111 = vmatpush2.msra.mxu0 0.0
    %112 = vmatprep.subr.mxu0 0.0
    %113 = vmatpush2.msra.mxu0 0.0
    %114 = vmatprep.subr.mxu0 0.0
    %115 = vmatpush2.msra.mxu0 0.0
    %116 = vmatprep.subr.mxu0 0.0
    %117 = vmatpush2.msra.mxu0 0.0
    %118 = vmatprep.subr.mxu0 0.0
    %119 = vmatpush2.msra.mxu0 0.0
    %120 = vmatprep.subr.mxu0 0.0
    %121 = vmatpush2.msra.mxu0 0.0
    %122 = vmatprep.subr.mxu0 0.0
    %123 = vmatpush2.msra.mxu0 0.0
    %124 = vmatprep.subr.mxu0 0.0
    %125 = vmatpush2.msra.mxu0 0.0
    %126 = vmatprep.subr.mxu0 0.0
    %127 = vmatpush2.msra.mxu0 0.0
    %128 = vmatprep.subr.mxu0 0.0
    %129 = vmatpush2.msra.mxu0 0.0
    %130 = vmatprep.subr.mxu0 0.0
    %131 = vmatpush2.msra.mxu0 0.0
    %132 = vmatprep.subr.mxu0 0.0
    %133 = vmatpush2.msra.mxu0 0.0
    %134 = vmatprep.subr.mxu0 0.0
    %135 = vmatpush2.msra.mxu0 0.0
    %136 = vmatprep.subr.mxu0 0.0
    %137 = vmatpush2.msra.mxu0 0.0
    %138 = vmatprep.subr.mxu0 0.0
    %139 = vmatpush2.msra.mxu0 0.0
    %140 = vmatprep.mubr.f32.mxu0 0.0
    %141 = vmatmul.mubr.f32.gmra.mxu0 %v74
    %v142 = vpop.f32.mrf.mxu0
    %v143 = vadd.f32 %v70, %v142
    %v144 = vpop.f32.mrf.mxu0
    %145 = vdwg.mxu0
    %v146 = vmul.f32 %v143, 0.5
    %v147 = vmul.f32 %v143, 0.70710677
    %v148 = verf.f32.pop %v147
    %v149 = vadd.f32 %v148, 1.0
    %v150 = vmul.f32 %v146, %v149
    %v151 = vld [vmem:[#allocation7] sm:$0xff]
    %v152 = vld [vmem:[#allocation7 + $0x8] sm:$0xff]
    %v153 = vld [vmem:[#allocation7 + $0x10] sm:$0xff]
    %v154 = vld [vmem:[#allocation7 + $0x18] sm:$0xff]
    %v155 = vld [vmem:[%s4] sm:$0x1]
    %v157 = vlaneseq
    %v158 = vshrl.u32 %v157, 7
    %v159 = vsub.s32 0, %v158
    %v160 = vrot.slane %v155, %v159
    %v163 = vsel %vm72, %v150, 0
    %165 = vmatprep.subr.mxu0 0.0
    %166 = vmatpush1.msra.mxu0 0.0
    %167 = vmatprep.subr.mxu0 0.0
    %168 = vmatpush1.msra.mxu0 0.0
    %169 = vmatprep.subr.mxu0 0.0
    %170 = vmatpush1.msra.mxu0 0.0
    %171 = vmatprep.subr.mxu0 0.0
    %172 = vmatpush1.msra.mxu0 0.0
    %173 = vmatprep.subr.mxu0 0.0
    %174 = vmatpush1.msra.mxu0 0.0
    %175 = vmatprep.subr.mxu0 0.0
    %176 = vmatpush1.msra.mxu0 0.0
    %177 = vmatprep.subr.mxu0 0.0
    %178 = vmatpush1.msra.mxu0 0.0
    %179 = vmatprep.subr.mxu0 0.0
    %180 = vmatpush1.msra.mxu0 0.0
    %181 = vmatprep.subr.mxu0 0.0
    %182 = vmatpush1.msra.mxu0 0.0
    %183 = vmatprep.subr.mxu0 0.0
    %184 = vmatpush1.msra.mxu0 0.0
    %185 = vmatprep.subr.mxu0 0.0
    %186 = vmatpush1.msra.mxu0 0.0
    %187 = vmatprep.subr.mxu0 0.0
    %188 = vmatpush1.msra.mxu0 0.0
    %189 = vmatprep.subr.mxu0 0.0
    %190 = vmatpush1.msra.mxu0 %v154
    %191 = vmatprep.subr.mxu0 0.0
    %192 = vmatpush1.msra.mxu0 %v153
    %193 = vmatprep.subr.mxu0 0.0
    %194 = vmatpush1.msra.mxu0 %v152
    %195 = vmatprep.subr.mxu0 0.0
    %196 = vmatpush1.msra.mxu0 %v151
    %197 = vmatprep.subr.mxu0 0.0
    %198 = vmatpush2.msra.mxu0 0.0
    %199 = vmatprep.subr.mxu0 0.0
    %200 = vmatpush2.msra.mxu0 0.0
    %201 = vmatprep.subr.mxu0 0.0
    %202 = vmatpush2.msra.mxu0 0.0
    %203 = vmatprep.subr.mxu0 0.0
    %204 = vmatpush2.msra.mxu0 0.0
    %205 = vmatprep.subr.mxu0 0.0
    %206 = vmatpush2.msra.mxu0 0.0
    %207 = vmatprep.subr.mxu0 0.0
    %208 = vmatpush2.msra.mxu0 0.0
    %209 = vmatprep.subr.mxu0 0.0
    %210 = vmatpush2.msra.mxu0 0.0
    %211 = vmatprep.subr.mxu0 0.0
    %212 = vmatpush2.msra.mxu0 0.0
    %213 = vmatprep.subr.mxu0 0.0
    %214 = vmatpush2.msra.mxu0 0.0
    %215 = vmatprep.subr.mxu0 0.0
    %216 = vmatpush2.msra.mxu0 0.0
    %217 = vmatprep.subr.mxu0 0.0
    %218 = vmatpush2.msra.mxu0 0.0
    %219 = vmatprep.subr.mxu0 0.0
    %220 = vmatpush2.msra.mxu0 0.0
    %221 = vmatprep.subr.mxu0 0.0
    %222 = vmatpush2.msra.mxu0 0.0
    %223 = vmatprep.subr.mxu0 0.0
    %224 = vmatpush2.msra.mxu0 0.0
    %225 = vmatprep.subr.mxu0 0.0
    %226 = vmatpush2.msra.mxu0 0.0
    %227 = vmatprep.subr.mxu0 0.0
    %228 = vmatpush2.msra.mxu0 0.0
    %229 = vmatprep.mubr.f32.mxu0 0.0
    %230 = vmatmul.mubr.f32.gmra.mxu0 %v163
    %v231 = vpop.f32.mrf.mxu0
    %v232 = vadd.f32 %v160, %v231
    %v233 = vpop.f32.mrf.mxu0
    %234 = vdwg.mxu0
    %235 = vst [vmem:[#allocation8] sm:$0x3] %v232
    // Predicated region
    $region34: #{tpu_custom_call.1} parent=1 // pred_check
      _
    $region35: #{tpu_custom_call.1} parent=1 // pred_check_branch
      %237 = sbr.rel (0) target = $region37
    $region36: #{tpu_custom_call.1} parent=1 // pred_region
      %s239 = ssub.s32 32, 32
      %240 = vsyncadd [#allocation4], %s239
      %s242 = sshll.u32 [#allocation8], 4
      %s243 = int_to_ptr.vmem [resolvable:$true] %s242
      %245 = dma.vmem_to_hbm [thread:$0]  %s243, 32, %s5, [#allocation4]
    $region37: #{tpu_custom_call.1} parent=1 // pred_fallthru
      _
    // Predicated region
    $region38: #{tpu_custom_call.1} parent=1 // pred_check
      _
    $region39: #{tpu_custom_call.1} parent=1 // pred_check_branch
      %247 = sbr.rel (0) target = $region41
    $region40: #{tpu_custom_call.1} parent=1 // pred_region
      %248 = dma.done [#allocation4], 32
    $region41: #{tpu_custom_call.1} parent=1 // pred_fallthru
      _
    %249 = vsyncpa [#allocation3], 1
    %250 = vsyncpa [#allocation6], 1
    %251 = vsyncpa [#allocation4], 1

// kernel: tpu_custom_call.1
$region0: #{tpu_custom_call.1}
  #allocation0 [shape = 'u32[]', space=smem, size = 0x4, offset = 0x4, fixed_abs, tag = 'smem constant byte address 0x4 - core index']
  #allocation1 [shape = 'u32[144,128]{1,0:T(1,128)}', space=vmem, size = 0x12000, scoped, tag = 'internal scratch']
  %s0 = inlined_call_operand.hbm [shape: f32[2,32], index: 0, kind: input, shape index: {}]
  %s1 = inlined_call_operand.hbm [shape: f32[32,32], index: 1, kind: input, shape index: {}]
  %s2 = inlined_call_operand.vmem [shape: f32[1,32], index: 2, kind: input, shape index: {}]
  %s3 = inlined_call_operand.hbm [shape: f32[32,128], index: 3, kind: input, shape index: {}]
  %s4 = inlined_call_operand.vmem [shape: f32[1,128], index: 4, kind: input, shape index: {}]
  %s5 = inlined_call_operand.hbm [shape: f32[2,128], index: 5, kind: output, shape index: {}]
  %s6 = sld [smem:[#allocation0]]
  $region42: #{tpu_custom_call.1} parent=0
    _
  %s8 = ssub.s32 1, %s6
  %s9 = scalar_select 0, %s8, %s6
  $region1: #{tpu_custom_call.1} parent=0
    #allocation2 [shape = 'u8[1024]{0}', space=vmem, size = 0x400, scoped, tag = 'input window, operand 0, single buffered']
    #allocation3 [shape = 's32[1]{0}', space=sflag, size = 0x4, scoped, tag = 'scoped memory for tpu_custom_call.1']
    #allocation4 [shape = 's32[1]{0}', space=sflag, size = 0x4, scoped, tag = 'scoped memory for tpu_custom_call.1']
    #allocation5 [shape = 'u8[16384]{0}', space=vmem, size = 0x4000, scoped, tag = 'input window, operand 1, single buffered']
    #allocation6 [shape = 's32[1]{0}', space=sflag, size = 0x4, scoped, tag = 'scoped memory for tpu_custom_call.1']
    #allocation7 [shape = 'u8[16384]{0}', space=vmem, size = 0x4000, scoped, tag = 'input window, operand 3, single buffered']
    #allocation8 [shape = 'u8[1024]{0}', space=vmem, size = 0x400, scoped, tag = 'output window, operand 0, single buffered']
    %10 = vsyncpa [#allocation3], 0
    %11 = vsyncpa [#allocation6], 0
    %12 = vsyncpa [#allocation4], 0
    // Predicated region
    $region2: #{tpu_custom_call.1} parent=1 // pred_check
      _
    $region3: #{tpu_custom_call.1} parent=1 // pred_check_branch
      %14 = sbr.rel (0) target = $region5
    $region4: #{tpu_custom_call.1} parent=1 // pred_region
      %s16 = ssub.s32 32, 32
      %17 = vsyncadd [#allocation3], %s16
      %s19 = sshll.u32 [#allocation2], 4
      %s20 = int_to_ptr.vmem [resolvable:$true] %s19
      %22 = dma.hbm_to_vmem [thread:$0]  %s0, 32, %s20, [#allocation3]
    $region5: #{tpu_custom_call.1} parent=1 // pred_fallthru
      _
    // Predicated region
    $region6: #{tpu_custom_call.1} parent=1 // pred_check
      _
    $region7: #{tpu_custom_call.1} parent=1 // pred_check_branch
      %24 = sbr.rel (0) target = $region9
    $region8: #{tpu_custom_call.1} parent=1 // pred_region
      %s26 = ssub.s32 512, 512
      %27 = vsyncadd [#allocation6], %s26
      %s28 = sshll.u32 [#allocation5], 4
      %s29 = int_to_ptr.vmem [resolvable:$true] %s28
      %34 = dma.hbm_to_vmem [thread:$0]  %s1, 512, %s29, [#allocation6], 128, 128, 8
    $region9: #{tpu_custom_call.1} parent=1 // pred_fallthru
      _
    // Predicated region
    $region10: #{tpu_custom_call.1} parent=1 // pred_check
      _
    $region11: #{tpu_custom_call.1} parent=1 // pred_check_branch
      %36 = sbr.rel (0) target = $region13
    $region12: #{tpu_custom_call.1} parent=1 // pred_region
      _
    $region13: #{tpu_custom_call.1} parent=1 // pred_fallthru
      _
    // Predicated region
    $region14: #{tpu_custom_call.1} parent=1 // pred_check
      _
    $region15: #{tpu_custom_call.1} parent=1 // pred_check_branch
      %38 = sbr.rel (0) target = $region17
    $region16: #{tpu_custom_call.1} parent=1 // pred_region
      %s40 = ssub.s32 512, 512
      %41 = vsyncadd [#allocation6], %s40
      %s42 = sshll.u32 [#allocation7], 4
      %s43 = int_to_ptr.vmem [resolvable:$true] %s42
      %48 = dma.hbm_to_vmem [thread:$0]  %s3, 512, %s43, [#allocation6], 128, 128, 8
    $region17: #{tpu_custom_call.1} parent=1 // pred_fallthru
      _
    // Predicated region
    $region18: #{tpu_custom_call.1} parent=1 // pred_check
      _
    $region19: #{tpu_custom_call.1} parent=1 // pred_check_branch
      %50 = sbr.rel (0) target = $region21
    $region20: #{tpu_custom_call.1} parent=1 // pred_region
      _
    $region21: #{tpu_custom_call.1} parent=1 // pred_fallthru
      _
    // Predicated region
    $region22: #{tpu_custom_call.1} parent=1 // pred_check
      _
    $region23: #{tpu_custom_call.1} parent=1 // pred_check_branch
      %52 = sbr.rel (0) target = $region25
    $region24: #{tpu_custom_call.1} parent=1 // pred_region
      %53 = dma.done [#allocation3], 32
    $region25: #{tpu_custom_call.1} parent=1 // pred_fallthru
      _
    // Predicated region
    $region26: #{tpu_custom_call.1} parent=1 // pred_check
      _
    $region27: #{tpu_custom_call.1} parent=1 // pred_check_branch
      %55 = sbr.rel (0) target = $region29
    $region28: #{tpu_custom_call.1} parent=1 // pred_region
      %56 = dma.done [#allocation6], 512
    $region29: #{tpu_custom_call.1} parent=1 // pred_fallthru
      _
    // Predicated region
    $region30: #{tpu_custom_call.1} parent=1 // pred_check
      _
    $region31: #{tpu_custom_call.1} parent=1 // pred_check_branch
      %58 = sbr.rel (0) target = $region33
    $region32: #{tpu_custom_call.1} parent=1 // pred_region
      %59 = dma.done [#allocation6], 512
    $region33: #{tpu_custom_call.1} parent=1 // pred_fallthru
      _
    %v60 = vld [vmem:[#allocation2] sm:$0x3]
    %v61 = vld [vmem:[#allocation5] sm:$0xff]
    %v62 = vld [vmem:[#allocation5 + $0x8] sm:$0xff]
    %v63 = vld [vmem:[#allocation5 + $0x10] sm:$0xff]
    %v64 = vld [vmem:[#allocation5 + $0x18] sm:$0xff]
    %v65 = vld [vmem:[%s2] sm:$0x1]
    %v67 = vlaneseq
    %v68 = vshrl.u32 %v67, 7
    %v69 = vsub.s32 0, %v68
    %v70 = vrot.slane %v65, %v69
    %vm72 = vcmask 261120
    %v74 = vsel %vm72, %v60, 0
    %76 = vmatprep.subr.mxu0 0.0
    %77 = vmatpush1.msra.mxu0 0.0
    %78 = vmatprep.subr.mxu0 0.0
    %79 = vmatpush1.msra.mxu0 0.0
    %80 = vmatprep.subr.mxu0 0.0
    %81 = vmatpush1.msra.mxu0 0.0
    %82 = vmatprep.subr.mxu0 0.0
    %83 = vmatpush1.msra.mxu0 0.0
    %84 = vmatprep.subr.mxu0 0.0
    %85 = vmatpush1.msra.mxu0 0.0
    %86 = vmatprep.subr.mxu0 0.0
    %87 = vmatpush1.msra.mxu0 0.0
    %88 = vmatprep.subr.mxu0 0.0
    %89 = vmatpush1.msra.mxu0 0.0
    %90 = vmatprep.subr.mxu0 0.0
    %91 = vmatpush1.msra.mxu0 0.0
    %92 = vmatprep.subr.mxu0 0.0
    %93 = vmatpush1.msra.mxu0 0.0
    %94 = vmatprep.subr.mxu0 0.0
    %95 = vmatpush1.msra.mxu0 0.0
    %96 = vmatprep.subr.mxu0 0.0
    %97 = vmatpush1.msra.mxu0 0.0
    %98 = vmatprep.subr.mxu0 0.0
    %99 = vmatpush1.msra.mxu0 0.0
    %100 = vmatprep.subr.mxu0 0.0
    %101 = vmatpush1.msra.mxu0 %v64
    %102 = vmatprep.subr.mxu0 0.0
    %103 = vmatpush1.msra.mxu0 %v63
    %104 = vmatprep.subr.mxu0 0.0
    %105 = vmatpush1.msra.mxu0 %v62
    %106 = vmatprep.subr.mxu0 0.0
    %107 = vmatpush1.msra.mxu0 %v61
    %108 = vmatprep.subr.mxu0 0.0
    %109 = vmatpush2.msra.mxu0 0.0
    %110 = vmatprep.subr.mxu0 0.0
    %111 = vmatpush2.msra.mxu0 0.0
    %112 = vmatprep.subr.mxu0 0.0
    %113 = vmatpush2.msra.mxu0 0.0
    %114 = vmatprep.subr.mxu0 0.0
    %115 = vmatpush2.msra.mxu0 0.0
    %116 = vmatprep.subr.mxu0 0.0
    %117 = vmatpush2.msra.mxu0 0.0
    %118 = vmatprep.subr.mxu0 0.0
    %119 = vmatpush2.msra.mxu0 0.0
    %120 = vmatprep.subr.mxu0 0.0
    %121 = vmatpush2.msra.mxu0 0.0
    %122 = vmatprep.subr.mxu0 0.0
    %123 = vmatpush2.msra.mxu0 0.0
    %124 = vmatprep.subr.mxu0 0.0
    %125 = vmatpush2.msra.mxu0 0.0
    %126 = vmatprep.subr.mxu0 0.0
    %127 = vmatpush2.msra.mxu0 0.0
    %128 = vmatprep.subr.mxu0 0.0
    %129 = vmatpush2.msra.mxu0 0.0
    %130 = vmatprep.subr.mxu0 0.0
    %131 = vmatpush2.msra.mxu0 0.0
    %132 = vmatprep.subr.mxu0 0.0
    %133 = vmatpush2.msra.mxu0 0.0
    %134 = vmatprep.subr.mxu0 0.0
    %135 = vmatpush2.msra.mxu0 0.0
    %136 = vmatprep.subr.mxu0 0.0
    %137 = vmatpush2.msra.mxu0 0.0
    %138 = vmatprep.subr.mxu0 0.0
    %139 = vmatpush2.msra.mxu0 0.0
    %140 = vmatprep.mubr.f32.mxu0 0.0
    %141 = vmatmul.mubr.f32.gmra.mxu0 %v74
    %v142 = vpop.f32.mrf.mxu0
    %v143 = vadd.f32 %v70, %v142
    %v144 = vpop.f32.mrf.mxu0
    %145 = vdwg.mxu0
    %v146 = vmul.f32 %v143, 0.5
    %v147 = vmul.f32 %v143, 0.70710677
    %v148 = verf.f32.pop %v147
    %v149 = vadd.f32 %v148, 1.0
    %v150 = vmul.f32 %v146, %v149
    %v151 = vld [vmem:[#allocation7] sm:$0xff]
    %v152 = vld [vmem:[#allocation7 + $0x8] sm:$0xff]
    %v153 = vld [vmem:[#allocation7 + $0x10] sm:$0xff]
    %v154 = vld [vmem:[#allocation7 + $0x18] sm:$0xff]
    %v155 = vld [vmem:[%s4] sm:$0x1]
    %v157 = vlaneseq
    %v158 = vshrl.u32 %v157, 7
    %v159 = vsub.s32 0, %v158
    %v160 = vrot.slane %v155, %v159
    %v163 = vsel %vm72, %v150, 0
    %165 = vmatprep.subr.mxu0 0.0
    %166 = vmatpush1.msra.mxu0 0.0
    %167 = vmatprep.subr.mxu0 0.0
    %168 = vmatpush1.msra.mxu0 0.0
    %169 = vmatprep.subr.mxu0 0.0
    %170 = vmatpush1.msra.mxu0 0.0
    %171 = vmatprep.subr.mxu0 0.0
    %172 = vmatpush1.msra.mxu0 0.0
    %173 = vmatprep.subr.mxu0 0.0
    %174 = vmatpush1.msra.mxu0 0.0
    %175 = vmatprep.subr.mxu0 0.0
    %176 = vmatpush1.msra.mxu0 0.0
    %177 = vmatprep.subr.mxu0 0.0
    %178 = vmatpush1.msra.mxu0 0.0
    %179 = vmatprep.subr.mxu0 0.0
    %180 = vmatpush1.msra.mxu0 0.0
    %181 = vmatprep.subr.mxu0 0.0
    %182 = vmatpush1.msra.mxu0 0.0
    %183 = vmatprep.subr.mxu0 0.0
    %184 = vmatpush1.msra.mxu0 0.0
    %185 = vmatprep.subr.mxu0 0.0
    %186 = vmatpush1.msra.mxu0 0.0
    %187 = vmatprep.subr.mxu0 0.0
    %188 = vmatpush1.msra.mxu0 0.0
    %189 = vmatprep.subr.mxu0 0.0
    %190 = vmatpush1.msra.mxu0 %v154
    %191 = vmatprep.subr.mxu0 0.0
    %192 = vmatpush1.msra.mxu0 %v153
    %193 = vmatprep.subr.mxu0 0.0
    %194 = vmatpush1.msra.mxu0 %v152
    %195 = vmatprep.subr.mxu0 0.0
    %196 = vmatpush1.msra.mxu0 %v151
    %197 = vmatprep.subr.mxu0 0.0
    %198 = vmatpush2.msra.mxu0 0.0
    %199 = vmatprep.subr.mxu0 0.0
    %200 = vmatpush2.msra.mxu0 0.0
    %201 = vmatprep.subr.mxu0 0.0
    %202 = vmatpush2.msra.mxu0 0.0
    %203 = vmatprep.subr.mxu0 0.0
    %204 = vmatpush2.msra.mxu0 0.0
    %205 = vmatprep.subr.mxu0 0.0
    %206 = vmatpush2.msra.mxu0 0.0
    %207 = vmatprep.subr.mxu0 0.0
    %208 = vmatpush2.msra.mxu0 0.0
    %209 = vmatprep.subr.mxu0 0.0
    %210 = vmatpush2.msra.mxu0 0.0
    %211 = vmatprep.subr.mxu0 0.0
    %212 = vmatpush2.msra.mxu0 0.0
    %213 = vmatprep.subr.mxu0 0.0
    %214 = vmatpush2.msra.mxu0 0.0
    %215 = vmatprep.subr.mxu0 0.0
    %216 = vmatpush2.msra.mxu0 0.0
    %217 = vmatprep.subr.mxu0 0.0
    %218 = vmatpush2.msra.mxu0 0.0
    %219 = vmatprep.subr.mxu0 0.0
    %220 = vmatpush2.msra.mxu0 0.0
    %221 = vmatprep.subr.mxu0 0.0
    %222 = vmatpush2.msra.mxu0 0.0
    %223 = vmatprep.subr.mxu0 0.0
    %224 = vmatpush2.msra.mxu0 0.0
    %225 = vmatprep.subr.mxu0 0.0
    %226 = vmatpush2.msra.mxu0 0.0
    %227 = vmatprep.subr.mxu0 0.0
    %228 = vmatpush2.msra.mxu0 0.0
    %229 = vmatprep.mubr.f32.mxu0 0.0
    %230 = vmatmul.mubr.f32.gmra.mxu0 %v163
    %v231 = vpop.f32.mrf.mxu0
    %v232 = vadd.f32 %v160, %v231
    %v233 = vpop.f32.mrf.mxu0
    %234 = vdwg.mxu0
    %235 = vst [vmem:[#allocation8] sm:$0x3] %v232
    // Predicated region
    $region34: #{tpu_custom_call.1} parent=1 // pred_check
      _
    $region35: #{tpu_custom_call.1} parent=1 // pred_check_branch
      %237 = sbr.rel (0) target = $region37
    $region36: #{tpu_custom_call.1} parent=1 // pred_region
      %s239 = ssub.s32 32, 32
      %240 = vsyncadd [#allocation4], %s239
      %s242 = sshll.u32 [#allocation8], 4
      %s243 = int_to_ptr.vmem [resolvable:$true] %s242
      %245 = dma.vmem_to_hbm [thread:$0]  %s243, 32, %s5, [#allocation4]
    $region37: #{tpu_custom_call.1} parent=1 // pred_fallthru
      _
    // Predicated region
    $region38: #{tpu_custom_call.1} parent=1 // pred_check
      _
    $region39: #{tpu_custom_call.1} parent=1 // pred_check_branch
      %247 = sbr.rel (0) target = $region41
    $region40: #{tpu_custom_call.1} parent=1 // pred_region
      %248 = dma.done [#allocation4], 32
    $region41: #{tpu_custom_call.1} parent=1 // pred_fallthru
      _
    %249 = vsyncpa [#allocation3], 1
    %250 = vsyncpa [#allocation6], 1
    %251 = vsyncpa [#allocation4], 1

</llo_original>
